<compile_context>
chip_gen: v6e
topology: v6e:2x2x1
jax: 0.10.0
libtpu: 0.0.40
codegen_flags: <defaults>
</compile_context>

<pallas_src>
import jax
import jax.numpy as jnp
from jax.experimental import pallas as pl
from jax.experimental.pallas import tpu as pltpu


def _round_up(n, m):
    return ((n + m - 1) // m) * m


def _choose_tile_b(B, F):
    """Pick the batch-tile row count.

    Big enough that an x tile is ~2 MiB (amortizes per-grid-step overhead),
    small enough that the double-buffered f32 x tile stays within ~8 MiB of
    VMEM on every TPU generation, and split so v7x's two TensorCores both get
    grid steps when the batch allows it.
    """
    row_bytes = 4 * F                               # one f32 row of x
    target = (2 * 2**20) // row_bytes               # ~2 MiB x tile
    vmem_cap = (8 * 2**20) // (2 * row_bytes)       # x double-buffer <= ~8 MiB
    tb = max(8, min(target, vmem_cap))
    tb = min(tb, _round_up(B, 8))                   # never exceed (rounded) batch
    if B > 16:
        # Ensure >= 2 grid steps so ("parallel",) can shard across v7x's 2 TCs.
        tb = min(tb, _round_up(-(-B // 2), 8))
    return _round_up(tb, 8)


def _critic_kernel(x_ref, w1_ref, b1_ref, w2_ref, b2_ref, w3_ref, b3_ref, o_ref):
    # x arrives f32 straight from HBM; cast to bf16 in-kernel (VPU, hidden under
    # the x DMA) right before the MXU dot — no extra wrapper HBM pass.
    x = x_ref[...].astype(jnp.bfloat16)                       # (TB, F)

    # fc1 + ReLU  (bf16 MXU operands, f32 accumulation; bias/ReLU in f32)
    h1 = jnp.dot(x, w1_ref[...], preferred_element_type=jnp.float32) + b1_ref[...]
    h1 = jnp.maximum(h1, 0.0)                                 # (TB, 32)

    # fc2 + ReLU
    h2 = jnp.dot(h1.astype(jnp.bfloat16), w2_ref[...],
                 preferred_element_type=jnp.float32) + b2_ref[...]
    h2 = jnp.maximum(h2, 0.0)                                 # (TB, 16)

    # fc3 (16 -> 1): broadcast-multiply + lane reduction on the VPU/XLU instead
    # of a K=16, N=1 MXU matmul.
    v = jnp.sum(h2 * w3_ref[...], axis=-1, keepdims=True) + b3_ref[...]
    o_ref[...] = v.astype(o_ref.dtype)                        # (TB, 1)


def critic_forward(x, params):
    """x: (B, max_length**2) float32.  Returns (B, 1) float32."""
    w1, b1, w2, b2, w3, b3 = params
    B, F = x.shape

    # Weights are tiny: one-time wrapper cast to bf16 is negligible HBM traffic
    # and avoids re-casting them on the VPU every grid step.
    w1b = w1.astype(jnp.bfloat16)                     # (F, 32)
    w2b = w2.astype(jnp.bfloat16)                     # (32, 16)
    w3_row = w3.reshape(1, -1).astype(jnp.float32)    # (1, 16)
    b3_2d = b3.reshape(1, 1).astype(jnp.float32)      # (1, 1)

    tb = _choose_tile_b(B, F)
    grid_b = pl.cdiv(B, tb)

    # VMEM footprint estimate (bytes) -> explicit scoped-VMEM limit with
    # headroom, capped well inside v7x's 64 MiB physical VMEM.
    est = (2 * tb * F * 4                                   # x (f32, dbl-buffered)
           + 2 * tb * 4                                     # out (dbl-buffered)
           + 2 * (F * 32 * 2 + 32 * 16 * 2 + 4 * 65)        # weights/biases
           + tb * (32 + 32 + 16 + 16 + 1) * 4)              # f32 intermediates
    vmem_limit = int(min(48 * 2**20, max(16 * 2**20, 2 * est)))

    cost = pl.CostEstimate(
        flops=2 * B * (F * 32 + 32 * 16 + 16),
        transcendentals=0,
        bytes_accessed=4 * B * F + 4 * B + 2 * F * 32 + 2 * 32 * 16 + 4 * 65,
    )

    const_idx = lambda i: (0, 0)

    def _build(const_spec):
        return pl.pallas_call(
            _critic_kernel,
            out_shape=jax.ShapeDtypeStruct((B, 1), jnp.float32),
            grid_spec=pltpu.PrefetchScalarGridSpec(
                num_scalar_prefetch=0,
                grid=(grid_b,),
                in_specs=[
                    pl.BlockSpec((tb, F), lambda i: (i, 0)),   # x tile (streamed)
                    const_spec(w1b.shape),                     # (F, 32) bf16
                    const_spec(b1.shape),                      # (1, 32) f32
                    const_spec(w2b.shape),                     # (32, 16) bf16
                    const_spec(b2.shape),                      # (1, 16) f32
                    const_spec(w3_row.shape),                  # (1, 16) f32
                    const_spec(b3_2d.shape),                   # (1, 1)  f32
                ],
                out_specs=pl.BlockSpec((tb, 1), lambda i: (i, 0)),
            ),
            compiler_params=pltpu.CompilerParams(
                dimension_semantics=("parallel",),   # batch axis -> v7x 2-TC split
                vmem_limit_bytes=vmem_limit,
            ),
            cost_estimate=cost,
        )

    operands = (x, w1b, b1, w2b, b2, w3_row, b3_2d)
    try:
        # Constant-index operands never re-DMA; single-buffer them to free VMEM
        # (the non-trivial saving is w1's second F*32*2-byte buffer).
        single_buf = lambda shape: pl.BlockSpec(
            shape, const_idx, pipeline_mode=pl.Buffered(1))
        out = _build(single_buf)(*operands)
    except Exception:
        # Fallback for JAX versions without pipeline_mode / Buffered(1) support.
        default_buf = lambda shape: pl.BlockSpec(shape, const_idx)
        out = _build(default_buf)(*operands)

    return out


def init_critic_params(max_length, key):
    """Deterministic PyTorch-style (Kaiming-uniform-ish) init for the 3 Linears."""
    in_dim = max_length ** 2
    dims = [(in_dim, 32), (32, 16), (16, 1)]
    params = []
    for fan_in, fan_out in dims:
        kw, kb, key = jax.random.split(key, 3)
        bound = 1.0 / (fan_in ** 0.5)
        w = jax.random.uniform(kw, (fan_in, fan_out), jnp.float32, -bound, bound)
        b = jax.random.uniform(kb, (1, fan_out), jnp.float32, -bound, bound)
        params += [w, b]
    return tuple(params)


def critic_ref_bf16(x, params):
    """Pure-JAX reference mirroring the kernel's bf16-operand math exactly."""
    w1, b1, w2, b2, w3, b3 = params
    h1 = jnp.dot(x.astype(jnp.bfloat16), w1.astype(jnp.bfloat16),
                 preferred_element_type=jnp.float32) + b1
    h1 = jnp.maximum(h1, 0.0)
    h2 = jnp.dot(h1.astype(jnp.bfloat16), w2.astype(jnp.bfloat16),
                 preferred_element_type=jnp.float32) + b2
    h2 = jnp.maximum(h2, 0.0)
    return jnp.sum(h2 * w3.reshape(1, -1), axis=-1, keepdims=True) + b3.reshape(1, 1)


def critic_ref_f32(x, params):
    """Full-precision reference of the original PyTorch math (semantic check)."""
    w1, b1, w2, b2, w3, b3 = params
    h1 = jnp.maximum(x @ w1 + b1, 0.0)
    h2 = jnp.maximum(h1 @ w2 + b2, 0.0)
    return h2 @ w3 + b3


if __name__ == "__main__":
    key = jax.random.PRNGKey(0)
    max_length = 8          # -> input features F = max_length**2 = 64
    batch = 2

    k_x, k_p = jax.random.split(key)
    x = jax.random.normal(k_x, (batch, max_length ** 2), dtype=jnp.float32)
    params = init_critic_params(max_length, k_p)

    v = critic_forward(x, params)
    jax.block_until_ready(v)
    assert v.shape == (batch, 1)

    # Exact check against a reference doing the same bf16-operand math.
    v_bf16 = critic_ref_bf16(x, params)
    assert jnp.allclose(v, v_bf16, atol=1e-4, rtol=1e-4), (v, v_bf16)

    # Loose check against the full-f32 PyTorch-equivalent math (bf16 rounding).
    v_f32 = critic_ref_f32(x, params)
    assert jnp.allclose(v, v_f32, atol=5e-2, rtol=5e-2), (v, v_f32)

    print("KERNEL_OK")
</pallas_src>

<mosaic_0001>
module attributes {stable_mosaic.version = 11 : i64} {
  func.func @_critic_kernel(%arg0: i32, %arg1: memref<8x64xf32, #tpu.memory_space<vmem>>, %arg2: memref<64x32xbf16, #tpu.memory_space<vmem>>, %arg3: memref<1x32xf32, #tpu.memory_space<vmem>>, %arg4: memref<32x16xbf16, #tpu.memory_space<vmem>>, %arg5: memref<1x16xf32, #tpu.memory_space<vmem>>, %arg6: memref<1x16xf32, #tpu.memory_space<vmem>>, %arg7: memref<1x1xf32, #tpu.memory_space<vmem>>, %arg8: memref<8x1xf32, #tpu.memory_space<vmem>>) attributes {dimension_semantics = [#tpu.dimension_semantics<parallel>], iteration_bounds = array<i64: 1>, scalar_prefetch = 0 : i64, scratch_operands = 0 : i64, tpu.core_type = #tpu.core_type<tc>, window_params = [{transform_indices = @transform_0, window_bounds = array<i64: 8, 64>}, {pipeline_mode = #tpu.pipeline_mode<synchronous>, transform_indices = @transform_1, window_bounds = array<i64: 64, 32>}, {pipeline_mode = #tpu.pipeline_mode<synchronous>, transform_indices = @transform_2, window_bounds = array<i64: 1, 32>}, {pipeline_mode = #tpu.pipeline_mode<synchronous>, transform_indices = @transform_3, window_bounds = array<i64: 32, 16>}, {pipeline_mode = #tpu.pipeline_mode<synchronous>, transform_indices = @transform_4, window_bounds = array<i64: 1, 16>}, {pipeline_mode = #tpu.pipeline_mode<synchronous>, transform_indices = @transform_5, window_bounds = array<i64: 1, 16>}, {pipeline_mode = #tpu.pipeline_mode<synchronous>, transform_indices = @transform_6, window_bounds = array<i64: 1, 1>}, {transform_indices = @transform_7, window_bounds = array<i64: 8, 1>}]} {
    %c0 = arith.constant 0 : index
    %c0_0 = arith.constant 0 : index
    %0 = vector.load %arg1[%c0, %c0_0] : memref<8x64xf32, #tpu.memory_space<vmem>>, vector<8x64xf32>
    %1 = arith.truncf %0 : vector<8x64xf32> to vector<8x64xbf16>
    %c0_1 = arith.constant 0 : index
    %c0_2 = arith.constant 0 : index
    %2 = vector.load %arg2[%c0_1, %c0_2] : memref<64x32xbf16, #tpu.memory_space<vmem>>, vector<64x32xbf16>
    %cst = arith.constant dense<0.000000e+00> : vector<8x32xf32>
    %3 = tpu.matmul %1, %2, %cst {dimension_numbers = #tpu.dot_dimension_numbers<[1], [0], [0], [1], [0, 0, 1, 1], [], []>} : vector<8x64xbf16>, vector<64x32xbf16>, vector<8x32xf32> -> vector<8x32xf32>
    %c0_3 = arith.constant 0 : index
    %c0_4 = arith.constant 0 : index
    %4 = vector.load %arg3[%c0_3, %c0_4] : memref<1x32xf32, #tpu.memory_space<vmem>>, vector<1x32xf32>
    %5 = vector.broadcast %4 : vector<1x32xf32> to vector<8x32xf32>
    %6 = arith.addf %3, %5 : vector<8x32xf32>
    %cst_5 = arith.constant 0.000000e+00 : f32
    %7 = vector.broadcast %cst_5 : f32 to vector<8x32xf32>
    %8 = arith.maximumf %6, %7 : vector<8x32xf32>
    %9 = arith.truncf %8 : vector<8x32xf32> to vector<8x32xbf16>
    %c0_6 = arith.constant 0 : index
    %c0_7 = arith.constant 0 : index
    %10 = vector.load %arg4[%c0_6, %c0_7] : memref<32x16xbf16, #tpu.memory_space<vmem>>, vector<32x16xbf16>
    %cst_8 = arith.constant dense<0.000000e+00> : vector<8x16xf32>
    %11 = tpu.matmul %9, %10, %cst_8 {dimension_numbers = #tpu.dot_dimension_numbers<[1], [0], [0], [1], [0, 0, 1, 1], [], []>} : vector<8x32xbf16>, vector<32x16xbf16>, vector<8x16xf32> -> vector<8x16xf32>
    %c0_9 = arith.constant 0 : index
    %c0_10 = arith.constant 0 : index
    %12 = vector.load %arg5[%c0_9, %c0_10] : memref<1x16xf32, #tpu.memory_space<vmem>>, vector<1x16xf32>
    %13 = vector.broadcast %12 : vector<1x16xf32> to vector<8x16xf32>
    %14 = arith.addf %11, %13 : vector<8x16xf32>
    %cst_11 = arith.constant 0.000000e+00 : f32
    %15 = vector.broadcast %cst_11 : f32 to vector<8x16xf32>
    %16 = arith.maximumf %14, %15 : vector<8x16xf32>
    %c0_12 = arith.constant 0 : index
    %c0_13 = arith.constant 0 : index
    %17 = vector.load %arg6[%c0_12, %c0_13] : memref<1x16xf32, #tpu.memory_space<vmem>>, vector<1x16xf32>
    %18 = vector.broadcast %17 : vector<1x16xf32> to vector<8x16xf32>
    %19 = arith.mulf %16, %18 : vector<8x16xf32>
    %cst_14 = arith.constant dense<0.000000e+00> : vector<8xf32>
    %20 = vector.multi_reduction <add>, %19, %cst_14 [1] : vector<8x16xf32> to vector<8xf32>
    %21 = vector.shape_cast %20 : vector<8xf32> to vector<8x1xf32>
    %c0_15 = arith.constant 0 : index
    %c0_16 = arith.constant 0 : index
    %22 = vector.load %arg7[%c0_15, %c0_16] : memref<1x1xf32, #tpu.memory_space<vmem>>, vector<1x1xf32>
    %23 = vector.broadcast %22 : vector<1x1xf32> to vector<8x1xf32>
    %24 = arith.addf %21, %23 : vector<8x1xf32>
    %c0_17 = arith.constant 0 : index
    %c0_18 = arith.constant 0 : index
    %25 = vector.load %arg8[%c0_17, %c0_18] : memref<8x1xf32, #tpu.memory_space<vmem>>, vector<8x1xf32>
    tpu.vector_store %arg8[%c0_17, %c0_18], %24 {strides = array<i32>} : memref<8x1xf32, #tpu.memory_space<vmem>>, vector<8x1xf32>,
    return
  }
  func.func @transform_0(%arg0: i32) -> (i32, i32) {
    %c0_i32 = arith.constant 0 : i32
    %c0_i32_0 = arith.constant 0 : i32
    return %arg0, %c0_i32 : i32, i32
  }
  func.func @transform_1(%arg0: i32) -> (i32, i32) {
    %c0_i32 = arith.constant 0 : i32
    %c0_i32_0 = arith.constant 0 : i32
    %c0_i32_1 = arith.constant 0 : i32
    return %c0_i32, %c0_i32_0 : i32, i32
  }
  func.func @transform_2(%arg0: i32) -> (i32, i32) {
    %c0_i32 = arith.constant 0 : i32
    %c0_i32_0 = arith.constant 0 : i32
    %c0_i32_1 = arith.constant 0 : i32
    return %c0_i32, %c0_i32_0 : i32, i32
  }
  func.func @transform_3(%arg0: i32) -> (i32, i32) {
    %c0_i32 = arith.constant 0 : i32
    %c0_i32_0 = arith.constant 0 : i32
    %c0_i32_1 = arith.constant 0 : i32
    return %c0_i32, %c0_i32_0 : i32, i32
  }
  func.func @transform_4(%arg0: i32) -> (i32, i32) {
    %c0_i32 = arith.constant 0 : i32
    %c0_i32_0 = arith.constant 0 : i32
    %c0_i32_1 = arith.constant 0 : i32
    return %c0_i32, %c0_i32_0 : i32, i32
  }
  func.func @transform_5(%arg0: i32) -> (i32, i32) {
    %c0_i32 = arith.constant 0 : i32
    %c0_i32_0 = arith.constant 0 : i32
    %c0_i32_1 = arith.constant 0 : i32
    return %c0_i32, %c0_i32_0 : i32, i32
  }
  func.func @transform_6(%arg0: i32) -> (i32, i32) {
    %c0_i32 = arith.constant 0 : i32
    %c0_i32_0 = arith.constant 0 : i32
    %c0_i32_1 = arith.constant 0 : i32
    return %c0_i32, %c0_i32_0 : i32, i32
  }
  func.func @transform_7(%arg0: i32) -> (i32, i32) {
    %c0_i32 = arith.constant 0 : i32
    %c0_i32_0 = arith.constant 0 : i32
    return %arg0, %c0_i32 : i32, i32
  }
}

module attributes {stable_mosaic.version = 11 : i64} {
  func.func @_critic_kernel(%arg0: i32, %arg1: memref<8x64xf32, #tpu.memory_space<vmem>>, %arg2: memref<64x32xbf16, #tpu.memory_space<vmem>>, %arg3: memref<1x32xf32, #tpu.memory_space<vmem>>, %arg4: memref<32x16xbf16, #tpu.memory_space<vmem>>, %arg5: memref<1x16xf32, #tpu.memory_space<vmem>>, %arg6: memref<1x16xf32, #tpu.memory_space<vmem>>, %arg7: memref<1x1xf32, #tpu.memory_space<vmem>>, %arg8: memref<8x1xf32, #tpu.memory_space<vmem>>) attributes {dimension_semantics = [#tpu.dimension_semantics<parallel>], iteration_bounds = array<i64: 1>, scalar_prefetch = 0 : i64, scratch_operands = 0 : i64, tpu.core_type = #tpu.core_type<tc>, window_params = [{transform_indices = @transform_0, window_bounds = array<i64: 8, 64>}, {pipeline_mode = #tpu.pipeline_mode<synchronous>, transform_indices = @transform_1, window_bounds = array<i64: 64, 32>}, {pipeline_mode = #tpu.pipeline_mode<synchronous>, transform_indices = @transform_2, window_bounds = array<i64: 1, 32>}, {pipeline_mode = #tpu.pipeline_mode<synchronous>, transform_indices = @transform_3, window_bounds = array<i64: 32, 16>}, {pipeline_mode = #tpu.pipeline_mode<synchronous>, transform_indices = @transform_4, window_bounds = array<i64: 1, 16>}, {pipeline_mode = #tpu.pipeline_mode<synchronous>, transform_indices = @transform_5, window_bounds = array<i64: 1, 16>}, {pipeline_mode = #tpu.pipeline_mode<synchronous>, transform_indices = @transform_6, window_bounds = array<i64: 1, 1>}, {transform_indices = @transform_7, window_bounds = array<i64: 8, 1>}]} {
    %c0 = arith.constant 0 : index
    %c0_0 = arith.constant 0 : index
    %0 = vector.load %arg1[%c0, %c0_0] : memref<8x64xf32, #tpu.memory_space<vmem>>, vector<8x64xf32>
    %1 = arith.truncf %0 : vector<8x64xf32> to vector<8x64xbf16>
    %c0_1 = arith.constant 0 : index
    %c0_2 = arith.constant 0 : index
    %2 = vector.load %arg2[%c0_1, %c0_2] : memref<64x32xbf16, #tpu.memory_space<vmem>>, vector<64x32xbf16>
    %cst = arith.constant dense<0.000000e+00> : vector<8x32xf32>
    %3 = tpu.matmul %1, %2, %cst {dimension_numbers = #tpu.dot_dimension_numbers<[1], [0], [0], [1], [0, 0, 1, 1], [], []>} : vector<8x64xbf16>, vector<64x32xbf16>, vector<8x32xf32> -> vector<8x32xf32>
    %c0_3 = arith.constant 0 : index
    %c0_4 = arith.constant 0 : index
    %4 = vector.load %arg3[%c0_3, %c0_4] : memref<1x32xf32, #tpu.memory_space<vmem>>, vector<1x32xf32>
    %5 = vector.broadcast %4 : vector<1x32xf32> to vector<8x32xf32>
    %6 = arith.addf %3, %5 : vector<8x32xf32>
    %cst_5 = arith.constant 0.000000e+00 : f32
    %7 = vector.broadcast %cst_5 : f32 to vector<8x32xf32>
    %8 = arith.maximumf %6, %7 : vector<8x32xf32>
    %9 = arith.truncf %8 : vector<8x32xf32> to vector<8x32xbf16>
    %c0_6 = arith.constant 0 : index
    %c0_7 = arith.constant 0 : index
    %10 = vector.load %arg4[%c0_6, %c0_7] : memref<32x16xbf16, #tpu.memory_space<vmem>>, vector<32x16xbf16>
    %cst_8 = arith.constant dense<0.000000e+00> : vector<8x16xf32>
    %11 = tpu.matmul %9, %10, %cst_8 {dimension_numbers = #tpu.dot_dimension_numbers<[1], [0], [0], [1], [0, 0, 1, 1], [], []>} : vector<8x32xbf16>, vector<32x16xbf16>, vector<8x16xf32> -> vector<8x16xf32>
    %c0_9 = arith.constant 0 : index
    %c0_10 = arith.constant 0 : index
    %12 = vector.load %arg5[%c0_9, %c0_10] : memref<1x16xf32, #tpu.memory_space<vmem>>, vector<1x16xf32>
    %13 = vector.broadcast %12 : vector<1x16xf32> to vector<8x16xf32>
    %14 = arith.addf %11, %13 : vector<8x16xf32>
    %cst_11 = arith.constant 0.000000e+00 : f32
    %15 = vector.broadcast %cst_11 : f32 to vector<8x16xf32>
    %16 = arith.maximumf %14, %15 : vector<8x16xf32>
    %c0_12 = arith.constant 0 : index
    %c0_13 = arith.constant 0 : index
    %17 = vector.load %arg6[%c0_12, %c0_13] : memref<1x16xf32, #tpu.memory_space<vmem>>, vector<1x16xf32>
    %18 = vector.broadcast %17 : vector<1x16xf32> to vector<8x16xf32>
    %19 = arith.mulf %16, %18 : vector<8x16xf32>
    %cst_14 = arith.constant dense<0.000000e+00> : vector<8xf32>
    %20 = vector.multi_reduction <add>, %19, %cst_14 [1] : vector<8x16xf32> to vector<8xf32>
    %21 = vector.shape_cast %20 : vector<8xf32> to vector<8x1xf32>
    %c0_15 = arith.constant 0 : index
    %c0_16 = arith.constant 0 : index
    %22 = vector.load %arg7[%c0_15, %c0_16] : memref<1x1xf32, #tpu.memory_space<vmem>>, vector<1x1xf32>
    %23 = vector.broadcast %22 : vector<1x1xf32> to vector<8x1xf32>
    %24 = arith.addf %21, %23 : vector<8x1xf32>
    %c0_17 = arith.constant 0 : index
    %c0_18 = arith.constant 0 : index
    %25 = vector.load %arg8[%c0_17, %c0_18] : memref<8x1xf32, #tpu.memory_space<vmem>>, vector<8x1xf32>
    tpu.vector_store %arg8[%c0_17, %c0_18], %24 {strides = array<i32>} : memref<8x1xf32, #tpu.memory_space<vmem>>, vector<8x1xf32>,
    return
  }
  func.func @transform_0(%arg0: i32) -> (i32, i32) {
    %c0_i32 = arith.constant 0 : i32
    %c0_i32_0 = arith.constant 0 : i32
    return %arg0, %c0_i32 : i32, i32
  }
  func.func @transform_1(%arg0: i32) -> (i32, i32) {
    %c0_i32 = arith.constant 0 : i32
    %c0_i32_0 = arith.constant 0 : i32
    %c0_i32_1 = arith.constant 0 : i32
    return %c0_i32, %c0_i32_0 : i32, i32
  }
  func.func @transform_2(%arg0: i32) -> (i32, i32) {
    %c0_i32 = arith.constant 0 : i32
    %c0_i32_0 = arith.constant 0 : i32
    %c0_i32_1 = arith.constant 0 : i32
    return %c0_i32, %c0_i32_0 : i32, i32
  }
  func.func @transform_3(%arg0: i32) -> (i32, i32) {
    %c0_i32 = arith.constant 0 : i32
    %c0_i32_0 = arith.constant 0 : i32
    %c0_i32_1 = arith.constant 0 : i32
    return %c0_i32, %c0_i32_0 : i32, i32
  }
  func.func @transform_4(%arg0: i32) -> (i32, i32) {
    %c0_i32 = arith.constant 0 : i32
    %c0_i32_0 = arith.constant 0 : i32
    %c0_i32_1 = arith.constant 0 : i32
    return %c0_i32, %c0_i32_0 : i32, i32
  }
  func.func @transform_5(%arg0: i32) -> (i32, i32) {
    %c0_i32 = arith.constant 0 : i32
    %c0_i32_0 = arith.constant 0 : i32
    %c0_i32_1 = arith.constant 0 : i32
    return %c0_i32, %c0_i32_0 : i32, i32
  }
  func.func @transform_6(%arg0: i32) -> (i32, i32) {
    %c0_i32 = arith.constant 0 : i32
    %c0_i32_0 = arith.constant 0 : i32
    %c0_i32_1 = arith.constant 0 : i32
    return %c0_i32, %c0_i32_0 : i32, i32
  }
  func.func @transform_7(%arg0: i32) -> (i32, i32) {
    %c0_i32 = arith.constant 0 : i32
    %c0_i32_0 = arith.constant 0 : i32
    return %arg0, %c0_i32 : i32, i32
  }
}

</mosaic_0001>

<llo_original>
// kernel: tpu_custom_call.1
$region0: #{tpu_custom_call.1}
  #allocation0 [shape = 'u32[]', space=smem, size = 0x4, offset = 0x4, fixed_abs, tag = 'smem constant byte address 0x4 - core index']
  #allocation1 [shape = 'u32[144,128]{1,0:T(1,128)}', space=vmem, size = 0x12000, scoped, tag = 'internal scratch']
  #allocation2 [shape = 'f32[1,1]{1,0:T(1,128)S(1)}', space=vmem, size = 0x200, scoped, tag = 'scoped memory for tpu_custom_call.1']
  %s0 = inlined_call_operand.vmem [shape: f32[2,64], index: 0, kind: input, shape index: {}]
  %s1 = inlined_call_operand.vmem [shape: bf16[64,32], index: 1, kind: input, shape index: {}]
  %s2 = inlined_call_operand.vmem [shape: f32[1,32], index: 2, kind: input, shape index: {}]
  %s3 = inlined_call_operand.vmem [shape: bf16[32,16], index: 3, kind: input, shape index: {}]
  %s4 = inlined_call_operand.vmem [shape: f32[1,16], index: 4, kind: input, shape index: {}]
  %s5 = inlined_call_operand.vmem [shape: f32[1,16], index: 5, kind: input, shape index: {}]
  %s6 = inlined_call_operand.<no memory space> [shape: f32[1,1], index: 6, kind: input, shape index: {}]
  %s7 = inlined_call_operand.vmem [shape: f32[2,1], index: 7, kind: output, shape index: {}]
  %s8 = sld [smem:[#allocation0]]
  $region68: #{tpu_custom_call.1} parent=0
    _
  %s10 = ssub.s32 1, %s8
  %s11 = scalar_select 0, %s10, %s8
  %v12 = vstv %s6
  %13 = vst [vmem:[#allocation2] sm:$0x1] %v12
  $region1: #{tpu_custom_call.1} parent=0
    #allocation3 [shape = 'u8[4096]{0}', space=vmem, size = 0x1000, scoped, tag = 'output window, operand 0, single buffered']
    // Predicated region
    $region2: #{tpu_custom_call.1} parent=1 // pred_check
      _
    $region3: #{tpu_custom_call.1} parent=1 // pred_check_branch
      %15 = sbr.rel (0) target = $region5
    $region4: #{tpu_custom_call.1} parent=1 // pred_region
      _
    $region5: #{tpu_custom_call.1} parent=1 // pred_fallthru
      _
    // Predicated region
    $region6: #{tpu_custom_call.1} parent=1 // pred_check
      _
    $region7: #{tpu_custom_call.1} parent=1 // pred_check_branch
      %17 = sbr.rel (0) target = $region9
    $region8: #{tpu_custom_call.1} parent=1 // pred_region
      _
    $region9: #{tpu_custom_call.1} parent=1 // pred_fallthru
      _
    // Predicated region
    $region10: #{tpu_custom_call.1} parent=1 // pred_check
      _
    $region11: #{tpu_custom_call.1} parent=1 // pred_check_branch
      %19 = sbr.rel (0) target = $region13
    $region12: #{tpu_custom_call.1} parent=1 // pred_region
      _
    $region13: #{tpu_custom_call.1} parent=1 // pred_fallthru
      _
    // Predicated region
    $region14: #{tpu_custom_call.1} parent=1 // pred_check
      _
    $region15: #{tpu_custom_call.1} parent=1 // pred_check_branch
      %21 = sbr.rel (0) target = $region17
    $region16: #{tpu_custom_call.1} parent=1 // pred_region
      _
    $region17: #{tpu_custom_call.1} parent=1 // pred_fallthru
      _
    // Predicated region
    $region18: #{tpu_custom_call.1} parent=1 // pred_check
      _
    $region19: #{tpu_custom_call.1} parent=1 // pred_check_branch
      %23 = sbr.rel (0) target = $region21
    $region20: #{tpu_custom_call.1} parent=1 // pred_region
      _
    $region21: #{tpu_custom_call.1} parent=1 // pred_fallthru
      _
    // Predicated region
    $region22: #{tpu_custom_call.1} parent=1 // pred_check
      _
    $region23: #{tpu_custom_call.1} parent=1 // pred_check_branch
      %25 = sbr.rel (0) target = $region25
    $region24: #{tpu_custom_call.1} parent=1 // pred_region
      _
    $region25: #{tpu_custom_call.1} parent=1 // pred_fallthru
      _
    // Predicated region
    $region26: #{tpu_custom_call.1} parent=1 // pred_check
      _
    $region27: #{tpu_custom_call.1} parent=1 // pred_check_branch
      %27 = sbr.rel (0) target = $region29
    $region28: #{tpu_custom_call.1} parent=1 // pred_region
      _
    $region29: #{tpu_custom_call.1} parent=1 // pred_fallthru
      _
    %v29 = vld [vmem:[%s0] sm:$0xff]
    %v30 = vpack.c.bf16 %v29, %v29
    %v31 = vld [vmem:[%s1] sm:$0xf]
    %v32 = vld [vmem:[%s1 + $0x4] sm:$0xf]
    %v33 = vld [vmem:[%s1 + $0x8] sm:$0xf]
    %v34 = vld [vmem:[%s1 + $0xc] sm:$0xf]
    %v35 = vld [vmem:[%s1 + $0x10] sm:$0xf]
    %v36 = vld [vmem:[%s1 + $0x14] sm:$0xf]
    %v37 = vld [vmem:[%s1 + $0x18] sm:$0xf]
    %v38 = vld [vmem:[%s1 + $0x1c] sm:$0xf]
    %v39 = vld [vmem:[%s2] sm:$0x1]
    %v41 = vlaneseq
    %v42 = vshrl.u32 %v41, 7
    %v43 = vsub.s32 0, %v42
    %v44 = vrot.slane %v39, %v43
    %v54 = vunpack.c.l.b16 %v31
    %v55 = vunpack.c.l.b16 %v32
    %v56 = vunpack.c.l.b16 %v33
    %v57 = vunpack.c.l.b16 %v34
    %v58 = vunpack.c.l.b16 %v35
    %v59 = vunpack.c.l.b16 %v36
    %v60 = vunpack.c.l.b16 %v37
    %v61 = vunpack.c.l.b16 %v38
    %v62 = vpack.c.b16 %v55, %v54
    %v63 = vpack.c.b16 %v57, %v56
    %v64 = vpack.c.b16 %v59, %v58
    %v65 = vpack.c.b16 %v61, %v60
    %vm70 = vcmask 523264
    %v72 = vsel %vm70, %v30, 0
    %74 = vmatprep.subr.bf16.mxu0 0
    %75 = vmatpush1.bf16.msra.mxu0 0
    %76 = vmatprep.subr.bf16.mxu0 0
    %77 = vmatpush1.bf16.msra.mxu0 0
    %78 = vmatprep.subr.bf16.mxu0 0
    %79 = vmatpush1.bf16.msra.mxu0 0
    %80 = vmatprep.subr.bf16.mxu0 0
    %81 = vmatpush1.bf16.msra.mxu0 0
    %82 = vmatprep.subr.bf16.mxu0 0
    %83 = vmatpush1.bf16.msra.mxu0 %v65
    %84 = vmatprep.subr.bf16.mxu0 0
    %85 = vmatpush1.bf16.msra.mxu0 %v64
    %86 = vmatprep.subr.bf16.mxu0 0
    %87 = vmatpush1.bf16.msra.mxu0 %v63
    %88 = vmatprep.subr.bf16.mxu0 0
    %89 = vmatpush1.bf16.msra.mxu0 %v62
    %90 = vmatprep.subr.bf16.mxu0 0
    %91 = vmatpush2.bf16.msra.mxu0 0
    %92 = vmatprep.subr.bf16.mxu0 0
    %93 = vmatpush2.bf16.msra.mxu0 0
    %94 = vmatprep.subr.bf16.mxu0 0
    %95 = vmatpush2.bf16.msra.mxu0 0
    %96 = vmatprep.subr.bf16.mxu0 0
    %97 = vmatpush2.bf16.msra.mxu0 0
    %98 = vmatprep.subr.bf16.mxu0 0
    %99 = vmatpush2.bf16.msra.mxu0 0
    %100 = vmatprep.subr.bf16.mxu0 0
    %101 = vmatpush2.bf16.msra.mxu0 0
    %102 = vmatprep.subr.bf16.mxu0 0
    %103 = vmatpush2.bf16.msra.mxu0 0
    %104 = vmatprep.subr.bf16.mxu0 0
    %105 = vmatpush2.bf16.msra.mxu0 0
    %106 = vmatprep.mubr.bf16.mxu0 0
    %107 = vmatmul.mubr.bf16.gmra.mxu0 %v72
    %v108 = vpop.f32.mrf.mxu0
    %v109 = vadd.f32 %v44, %v108
    %v110 = vpop.f32.mrf.mxu0
    %v111 = vpop.f32.mrf.mxu0
    %v112 = vpop.f32.mrf.mxu0
    %113 = vdwg.mxu0
    %v114 = vmax.f32 %v109, 0.0
    %v115 = vpack.c.bf16 %v114, %v114
    %v116 = vld [vmem:[%s3] sm:$0xf]
    %v117 = vld [vmem:[%s3 + $0x4] sm:$0xf]
    %v118 = vld [vmem:[%s3 + $0x8] sm:$0xf]
    %v119 = vld [vmem:[%s3 + $0xc] sm:$0xf]
    %v120 = vld [vmem:[%s4] sm:$0x1]
    %v122 = vlaneseq
    %v123 = vshrl.u32 %v122, 7
    %v124 = vsub.s32 0, %v123
    %v125 = vrot.slane %v120, %v124
    %v131 = vunpack.c.l.b16 %v116
    %v132 = vunpack.c.l.b16 %v117
    %v133 = vunpack.c.l.b16 %v118
    %v134 = vunpack.c.l.b16 %v119
    %v135 = vpack.c.b16 %v132, %v131
    %v136 = vpack.c.b16 %v134, %v133
    %vm139 = vcmask 261120
    %v141 = vsel %vm139, %v115, 0
    %143 = vmatprep.subr.bf16.mxu0 0
    %144 = vmatpush1.bf16.msra.mxu0 0
    %145 = vmatprep.subr.bf16.mxu0 0
    %146 = vmatpush1.bf16.msra.mxu0 0
    %147 = vmatprep.subr.bf16.mxu0 0
    %148 = vmatpush1.bf16.msra.mxu0 0
    %149 = vmatprep.subr.bf16.mxu0 0
    %150 = vmatpush1.bf16.msra.mxu0 0
    %151 = vmatprep.subr.bf16.mxu0 0
    %152 = vmatpush1.bf16.msra.mxu0 0
    %153 = vmatprep.subr.bf16.mxu0 0
    %154 = vmatpush1.bf16.msra.mxu0 0
    %155 = vmatprep.subr.bf16.mxu0 0
    %156 = vmatpush1.bf16.msra.mxu0 %v136
    %157 = vmatprep.subr.bf16.mxu0 0
    %158 = vmatpush1.bf16.msra.mxu0 %v135
    %159 = vmatprep.subr.bf16.mxu0 0
    %160 = vmatpush2.bf16.msra.mxu0 0
    %161 = vmatprep.subr.bf16.mxu0 0
    %162 = vmatpush2.bf16.msra.mxu0 0
    %163 = vmatprep.subr.bf16.mxu0 0
    %164 = vmatpush2.bf16.msra.mxu0 0
    %165 = vmatprep.subr.bf16.mxu0 0
    %166 = vmatpush2.bf16.msra.mxu0 0
    %167 = vmatprep.subr.bf16.mxu0 0
    %168 = vmatpush2.bf16.msra.mxu0 0
    %169 = vmatprep.subr.bf16.mxu0 0
    %170 = vmatpush2.bf16.msra.mxu0 0
    %171 = vmatprep.subr.bf16.mxu0 0
    %172 = vmatpush2.bf16.msra.mxu0 0
    %173 = vmatprep.subr.bf16.mxu0 0
    %174 = vmatpush2.bf16.msra.mxu0 0
    %175 = vmatprep.mubr.bf16.mxu0 0
    %176 = vmatmul.mubr.bf16.gmra.mxu0 %v141
    %v177 = vpop.f32.mrf.mxu0
    %v178 = vadd.f32 %v125, %v177
    %v179 = vpop.f32.mrf.mxu0
    %v180 = vpop.f32.mrf.mxu0
    %v181 = vpop.f32.mrf.mxu0
    %182 = vdwg.mxu0
    %v183 = vmax.f32 %v178, 0.0
    %v184 = vld [vmem:[%s5] sm:$0x1]
    %v186 = vlaneseq
    %v187 = vshrl.u32 %v186, 7
    %v188 = vsub.s32 0, %v187
    %v189 = vrot.slane %v184, %v188
    %v191 = vmul.f32 %v183, %v189
    %vm192 = vcmask 130048
    %v193 = vsel %vm192, %v191, 0.0
    %194 = vadd.xlane.f32.xlu0 %v193
    %v195 = vpop.xlane.xlu0 %194
    %v196 = vld [vmem:[#allocation2] sm:$0x1]
    %v198 = vlaneseq
    %v199 = vshrl.u32 %v198, 7
    %v200 = vsub.s32 0, %v199
    %v201 = vrot.slane %v196, %v200
    %v203 = vadd.f32 %v195, %v201
    %vm204 = vcmask 7168
    %205 = vst.msk [vmem:[#allocation3] sm:$0xff] %vm204, %v203
    // Predicated region
    $region30: #{tpu_custom_call.1} parent=1 // pred_check
      _
    $region31: #{tpu_custom_call.1} parent=1 // pred_check_branch
      %207 = sbr.rel (0) target = $region33
    $region32: #{tpu_custom_call.1} parent=1 // pred_region
      // Predicated region
      $region34: #{tpu_custom_call.1} parent=32 // pred_check
        _
      $region35: #{tpu_custom_call.1} parent=32 // pred_check_branch
        %209 = sbr.rel (0) target = $region37
      $region36: #{tpu_custom_call.1} parent=32 // pred_region
        // Predicated region
        $region38: #{tpu_custom_call.1} parent=36 // pred_check
          _
        $region39: #{tpu_custom_call.1} parent=36 // pred_check_branch
          %211 = sbr.rel target = $region41
        $region40: #{tpu_custom_call.1} parent=36 // pred_region
          // Predicated region
          $region53: #{tpu_custom_call.1} parent=40 // pred_check
            _
          $region54: #{tpu_custom_call.1} parent=40 // pred_check_branch
            %227 = sbr.rel (0) target = $region56
          $region55: #{tpu_custom_call.1} parent=40 // pred_region
            %s229 = ssub.s32 4, 1
            loop: start=0, step=1, limit=1
            $region57: #{tpu_custom_call.1} parent=55 // loop_pre_header
              _
            $region58: #{tpu_custom_call.1} parent=55 // loop_header
              %s231 = sphi 0, %s235
              %p232 = scmp.ge.s32.totalorder %s231, 1
              %s236 = sphi [#allocation3], [#allocation3]
              %s237 = sphi %s7, %s7
            $region59: #{tpu_custom_call.1} parent=55 // loop_header_branch
              %234 = sbr.rel (%p232) target = $region63
            $region60: #{tpu_custom_call.1} parent=55 // loop_body
              %v238 = vld [vmem:[%s236] sm:%s229]
              %239 = vst [vmem:[%s237] sm:%s229] %v238
            $region61: #{tpu_custom_call.1} parent=55 // loop_footer
              %s235 = sadd.s32 1, %s231
            $region62: #{tpu_custom_call.1} parent=55 // loop_footer_branch
              %230 = sbr.rel target = $region58
            $region63: #{tpu_custom_call.1} parent=55 // loop_exit
              _
          $region56: #{tpu_custom_call.1} parent=40 // pred_fallthru
            _
        $region41: #{tpu_custom_call.1} parent=36 // pred_fallthru
          _
        // Predicated region
        $region42: #{tpu_custom_call.1} parent=36 // pred_check
          _
        $region43: #{tpu_custom_call.1} parent=36 // pred_check_branch
          %213 = sbr.rel (0) target = $region45
        $region44: #{tpu_custom_call.1} parent=36 // pred_region
          %s215 = ssub.s32 4, 1
          loop: start=0, step=1, limit=1
          $region46: #{tpu_custom_call.1} parent=44 // loop_pre_header
            _
          $region47: #{tpu_custom_call.1} parent=44 // loop_header
            %s217 = sphi 0, %s221
            %p218 = scmp.ge.s32.totalorder %s217, 1
            %s222 = sphi [#allocation3], [#allocation3]
            %s223 = sphi %s7, %s7
          $region48: #{tpu_custom_call.1} parent=44 // loop_header_branch
            %220 = sbr.rel (%p218) target = $region52
          $region49: #{tpu_custom_call.1} parent=44 // loop_body
            %v224 = vld [vmem:[%s222] sm:%s215]
            %225 = vst [vmem:[%s223] sm:%s215] %v224
          $region50: #{tpu_custom_call.1} parent=44 // loop_footer
            %s221 = sadd.s32 1, %s217
          $region51: #{tpu_custom_call.1} parent=44 // loop_footer_branch
            %216 = sbr.rel target = $region47
          $region52: #{tpu_custom_call.1} parent=44 // loop_exit
            _
        $region45: #{tpu_custom_call.1} parent=36 // pred_fallthru
          _
      $region37: #{tpu_custom_call.1} parent=32 // pred_fallthru
        _
      %240 = vnop
    $region33: #{tpu_custom_call.1} parent=1 // pred_fallthru
      _
    // Predicated region
    $region64: #{tpu_custom_call.1} parent=1 // pred_check
      _
    $region65: #{tpu_custom_call.1} parent=1 // pred_check_branch
      %242 = sbr.rel (0) target = $region67
    $region66: #{tpu_custom_call.1} parent=1 // pred_region
      _
    $region67: #{tpu_custom_call.1} parent=1 // pred_fallthru
      _

// kernel: tpu_custom_call.1
$region0: #{tpu_custom_call.1}
  #allocation0 [shape = 'u32[]', space=smem, size = 0x4, offset = 0x4, fixed_abs, tag = 'smem constant byte address 0x4 - core index']
  #allocation1 [shape = 'u32[144,128]{1,0:T(1,128)}', space=vmem, size = 0x12000, scoped, tag = 'internal scratch']
  #allocation2 [shape = 'f32[1,1]{1,0:T(1,128)S(1)}', space=vmem, size = 0x200, scoped, tag = 'scoped memory for tpu_custom_call.1']
  %s0 = inlined_call_operand.vmem [shape: f32[2,64], index: 0, kind: input, shape index: {}]
  %s1 = inlined_call_operand.vmem [shape: bf16[64,32], index: 1, kind: input, shape index: {}]
  %s2 = inlined_call_operand.vmem [shape: f32[1,32], index: 2, kind: input, shape index: {}]
  %s3 = inlined_call_operand.vmem [shape: bf16[32,16], index: 3, kind: input, shape index: {}]
  %s4 = inlined_call_operand.vmem [shape: f32[1,16], index: 4, kind: input, shape index: {}]
  %s5 = inlined_call_operand.vmem [shape: f32[1,16], index: 5, kind: input, shape index: {}]
  %s6 = inlined_call_operand.<no memory space> [shape: f32[1,1], index: 6, kind: input, shape index: {}]
  %s7 = inlined_call_operand.vmem [shape: f32[2,1], index: 7, kind: output, shape index: {}]
  %s8 = sld [smem:[#allocation0]]
  $region68: #{tpu_custom_call.1} parent=0
    _
  %s10 = ssub.s32 1, %s8
  %s11 = scalar_select 0, %s10, %s8
  %v12 = vstv %s6
  %13 = vst [vmem:[#allocation2] sm:$0x1] %v12
  $region1: #{tpu_custom_call.1} parent=0
    #allocation3 [shape = 'u8[4096]{0}', space=vmem, size = 0x1000, scoped, tag = 'output window, operand 0, single buffered']
    // Predicated region
    $region2: #{tpu_custom_call.1} parent=1 // pred_check
      _
    $region3: #{tpu_custom_call.1} parent=1 // pred_check_branch
      %15 = sbr.rel (0) target = $region5
    $region4: #{tpu_custom_call.1} parent=1 // pred_region
      _
    $region5: #{tpu_custom_call.1} parent=1 // pred_fallthru
      _
    // Predicated region
    $region6: #{tpu_custom_call.1} parent=1 // pred_check
      _
    $region7: #{tpu_custom_call.1} parent=1 // pred_check_branch
      %17 = sbr.rel (0) target = $region9
    $region8: #{tpu_custom_call.1} parent=1 // pred_region
      _
    $region9: #{tpu_custom_call.1} parent=1 // pred_fallthru
      _
    // Predicated region
    $region10: #{tpu_custom_call.1} parent=1 // pred_check
      _
    $region11: #{tpu_custom_call.1} parent=1 // pred_check_branch
      %19 = sbr.rel (0) target = $region13
    $region12: #{tpu_custom_call.1} parent=1 // pred_region
      _
    $region13: #{tpu_custom_call.1} parent=1 // pred_fallthru
      _
    // Predicated region
    $region14: #{tpu_custom_call.1} parent=1 // pred_check
      _
    $region15: #{tpu_custom_call.1} parent=1 // pred_check_branch
      %21 = sbr.rel (0) target = $region17
    $region16: #{tpu_custom_call.1} parent=1 // pred_region
      _
    $region17: #{tpu_custom_call.1} parent=1 // pred_fallthru
      _
    // Predicated region
    $region18: #{tpu_custom_call.1} parent=1 // pred_check
      _
    $region19: #{tpu_custom_call.1} parent=1 // pred_check_branch
      %23 = sbr.rel (0) target = $region21
    $region20: #{tpu_custom_call.1} parent=1 // pred_region
      _
    $region21: #{tpu_custom_call.1} parent=1 // pred_fallthru
      _
    // Predicated region
    $region22: #{tpu_custom_call.1} parent=1 // pred_check
      _
    $region23: #{tpu_custom_call.1} parent=1 // pred_check_branch
      %25 = sbr.rel (0) target = $region25
    $region24: #{tpu_custom_call.1} parent=1 // pred_region
      _
    $region25: #{tpu_custom_call.1} parent=1 // pred_fallthru
      _
    // Predicated region
    $region26: #{tpu_custom_call.1} parent=1 // pred_check
      _
    $region27: #{tpu_custom_call.1} parent=1 // pred_check_branch
      %27 = sbr.rel (0) target = $region29
    $region28: #{tpu_custom_call.1} parent=1 // pred_region
      _
    $region29: #{tpu_custom_call.1} parent=1 // pred_fallthru
      _
    %v29 = vld [vmem:[%s0] sm:$0xff]
    %v30 = vpack.c.bf16 %v29, %v29
    %v31 = vld [vmem:[%s1] sm:$0xf]
    %v32 = vld [vmem:[%s1 + $0x4] sm:$0xf]
    %v33 = vld [vmem:[%s1 + $0x8] sm:$0xf]
    %v34 = vld [vmem:[%s1 + $0xc] sm:$0xf]
    %v35 = vld [vmem:[%s1 + $0x10] sm:$0xf]
    %v36 = vld [vmem:[%s1 + $0x14] sm:$0xf]
    %v37 = vld [vmem:[%s1 + $0x18] sm:$0xf]
    %v38 = vld [vmem:[%s1 + $0x1c] sm:$0xf]
    %v39 = vld [vmem:[%s2] sm:$0x1]
    %v41 = vlaneseq
    %v42 = vshrl.u32 %v41, 7
    %v43 = vsub.s32 0, %v42
    %v44 = vrot.slane %v39, %v43
    %v54 = vunpack.c.l.b16 %v31
    %v55 = vunpack.c.l.b16 %v32
    %v56 = vunpack.c.l.b16 %v33
    %v57 = vunpack.c.l.b16 %v34
    %v58 = vunpack.c.l.b16 %v35
    %v59 = vunpack.c.l.b16 %v36
    %v60 = vunpack.c.l.b16 %v37
    %v61 = vunpack.c.l.b16 %v38
    %v62 = vpack.c.b16 %v55, %v54
    %v63 = vpack.c.b16 %v57, %v56
    %v64 = vpack.c.b16 %v59, %v58
    %v65 = vpack.c.b16 %v61, %v60
    %vm70 = vcmask 523264
    %v72 = vsel %vm70, %v30, 0
    %74 = vmatprep.subr.bf16.mxu0 0
    %75 = vmatpush1.bf16.msra.mxu0 0
    %76 = vmatprep.subr.bf16.mxu0 0
    %77 = vmatpush1.bf16.msra.mxu0 0
    %78 = vmatprep.subr.bf16.mxu0 0
    %79 = vmatpush1.bf16.msra.mxu0 0
    %80 = vmatprep.subr.bf16.mxu0 0
    %81 = vmatpush1.bf16.msra.mxu0 0
    %82 = vmatprep.subr.bf16.mxu0 0
    %83 = vmatpush1.bf16.msra.mxu0 %v65
    %84 = vmatprep.subr.bf16.mxu0 0
    %85 = vmatpush1.bf16.msra.mxu0 %v64
    %86 = vmatprep.subr.bf16.mxu0 0
    %87 = vmatpush1.bf16.msra.mxu0 %v63
    %88 = vmatprep.subr.bf16.mxu0 0
    %89 = vmatpush1.bf16.msra.mxu0 %v62
    %90 = vmatprep.subr.bf16.mxu0 0
    %91 = vmatpush2.bf16.msra.mxu0 0
    %92 = vmatprep.subr.bf16.mxu0 0
    %93 = vmatpush2.bf16.msra.mxu0 0
    %94 = vmatprep.subr.bf16.mxu0 0
    %95 = vmatpush2.bf16.msra.mxu0 0
    %96 = vmatprep.subr.bf16.mxu0 0
    %97 = vmatpush2.bf16.msra.mxu0 0
    %98 = vmatprep.subr.bf16.mxu0 0
    %99 = vmatpush2.bf16.msra.mxu0 0
    %100 = vmatprep.subr.bf16.mxu0 0
    %101 = vmatpush2.bf16.msra.mxu0 0
    %102 = vmatprep.subr.bf16.mxu0 0
    %103 = vmatpush2.bf16.msra.mxu0 0
    %104 = vmatprep.subr.bf16.mxu0 0
    %105 = vmatpush2.bf16.msra.mxu0 0
    %106 = vmatprep.mubr.bf16.mxu0 0
    %107 = vmatmul.mubr.bf16.gmra.mxu0 %v72
    %v108 = vpop.f32.mrf.mxu0
    %v109 = vadd.f32 %v44, %v108
    %v110 = vpop.f32.mrf.mxu0
    %v111 = vpop.f32.mrf.mxu0
    %v112 = vpop.f32.mrf.mxu0
    %113 = vdwg.mxu0
    %v114 = vmax.f32 %v109, 0.0
    %v115 = vpack.c.bf16 %v114, %v114
    %v116 = vld [vmem:[%s3] sm:$0xf]
    %v117 = vld [vmem:[%s3 + $0x4] sm:$0xf]
    %v118 = vld [vmem:[%s3 + $0x8] sm:$0xf]
    %v119 = vld [vmem:[%s3 + $0xc] sm:$0xf]
    %v120 = vld [vmem:[%s4] sm:$0x1]
    %v122 = vlaneseq
    %v123 = vshrl.u32 %v122, 7
    %v124 = vsub.s32 0, %v123
    %v125 = vrot.slane %v120, %v124
    %v131 = vunpack.c.l.b16 %v116
    %v132 = vunpack.c.l.b16 %v117
    %v133 = vunpack.c.l.b16 %v118
    %v134 = vunpack.c.l.b16 %v119
    %v135 = vpack.c.b16 %v132, %v131
    %v136 = vpack.c.b16 %v134, %v133
    %vm139 = vcmask 261120
    %v141 = vsel %vm139, %v115, 0
    %143 = vmatprep.subr.bf16.mxu0 0
    %144 = vmatpush1.bf16.msra.mxu0 0
    %145 = vmatprep.subr.bf16.mxu0 0
    %146 = vmatpush1.bf16.msra.mxu0 0
    %147 = vmatprep.subr.bf16.mxu0 0
    %148 = vmatpush1.bf16.msra.mxu0 0
    %149 = vmatprep.subr.bf16.mxu0 0
    %150 = vmatpush1.bf16.msra.mxu0 0
    %151 = vmatprep.subr.bf16.mxu0 0
    %152 = vmatpush1.bf16.msra.mxu0 0
    %153 = vmatprep.subr.bf16.mxu0 0
    %154 = vmatpush1.bf16.msra.mxu0 0
    %155 = vmatprep.subr.bf16.mxu0 0
    %156 = vmatpush1.bf16.msra.mxu0 %v136
    %157 = vmatprep.subr.bf16.mxu0 0
    %158 = vmatpush1.bf16.msra.mxu0 %v135
    %159 = vmatprep.subr.bf16.mxu0 0
    %160 = vmatpush2.bf16.msra.mxu0 0
    %161 = vmatprep.subr.bf16.mxu0 0
    %162 = vmatpush2.bf16.msra.mxu0 0
    %163 = vmatprep.subr.bf16.mxu0 0
    %164 = vmatpush2.bf16.msra.mxu0 0
    %165 = vmatprep.subr.bf16.mxu0 0
    %166 = vmatpush2.bf16.msra.mxu0 0
    %167 = vmatprep.subr.bf16.mxu0 0
    %168 = vmatpush2.bf16.msra.mxu0 0
    %169 = vmatprep.subr.bf16.mxu0 0
    %170 = vmatpush2.bf16.msra.mxu0 0
    %171 = vmatprep.subr.bf16.mxu0 0
    %172 = vmatpush2.bf16.msra.mxu0 0
    %173 = vmatprep.subr.bf16.mxu0 0
    %174 = vmatpush2.bf16.msra.mxu0 0
    %175 = vmatprep.mubr.bf16.mxu0 0
    %176 = vmatmul.mubr.bf16.gmra.mxu0 %v141
    %v177 = vpop.f32.mrf.mxu0
    %v178 = vadd.f32 %v125, %v177
    %v179 = vpop.f32.mrf.mxu0
    %v180 = vpop.f32.mrf.mxu0
    %v181 = vpop.f32.mrf.mxu0
    %182 = vdwg.mxu0
    %v183 = vmax.f32 %v178, 0.0
    %v184 = vld [vmem:[%s5] sm:$0x1]
    %v186 = vlaneseq
    %v187 = vshrl.u32 %v186, 7
    %v188 = vsub.s32 0, %v187
    %v189 = vrot.slane %v184, %v188
    %v191 = vmul.f32 %v183, %v189
    %vm192 = vcmask 130048
    %v193 = vsel %vm192, %v191, 0.0
    %194 = vadd.xlane.f32.xlu0 %v193
    %v195 = vpop.xlane.xlu0 %194
    %v196 = vld [vmem:[#allocation2] sm:$0x1]
    %v198 = vlaneseq
    %v199 = vshrl.u32 %v198, 7
    %v200 = vsub.s32 0, %v199
    %v201 = vrot.slane %v196, %v200
    %v203 = vadd.f32 %v195, %v201
    %vm204 = vcmask 7168
    %205 = vst.msk [vmem:[#allocation3] sm:$0xff] %vm204, %v203
    // Predicated region
    $region30: #{tpu_custom_call.1} parent=1 // pred_check
      _
    $region31: #{tpu_custom_call.1} parent=1 // pred_check_branch
      %207 = sbr.rel (0) target = $region33
    $region32: #{tpu_custom_call.1} parent=1 // pred_region
      // Predicated region
      $region34: #{tpu_custom_call.1} parent=32 // pred_check
        _
      $region35: #{tpu_custom_call.1} parent=32 // pred_check_branch
        %209 = sbr.rel (0) target = $region37
      $region36: #{tpu_custom_call.1} parent=32 // pred_region
        // Predicated region
        $region38: #{tpu_custom_call.1} parent=36 // pred_check
          _
        $region39: #{tpu_custom_call.1} parent=36 // pred_check_branch
          %211 = sbr.rel target = $region41
        $region40: #{tpu_custom_call.1} parent=36 // pred_region
          // Predicated region
          $region53: #{tpu_custom_call.1} parent=40 // pred_check
            _
          $region54: #{tpu_custom_call.1} parent=40 // pred_check_branch
            %227 = sbr.rel (0) target = $region56
          $region55: #{tpu_custom_call.1} parent=40 // pred_region
            %s229 = ssub.s32 4, 1
            loop: start=0, step=1, limit=1
            $region57: #{tpu_custom_call.1} parent=55 // loop_pre_header
              _
            $region58: #{tpu_custom_call.1} parent=55 // loop_header
              %s231 = sphi 0, %s235
              %p232 = scmp.ge.s32.totalorder %s231, 1
              %s236 = sphi [#allocation3], [#allocation3]
              %s237 = sphi %s7, %s7
            $region59: #{tpu_custom_call.1} parent=55 // loop_header_branch
              %234 = sbr.rel (%p232) target = $region63
            $region60: #{tpu_custom_call.1} parent=55 // loop_body
              %v238 = vld [vmem:[%s236] sm:%s229]
              %239 = vst [vmem:[%s237] sm:%s229] %v238
            $region61: #{tpu_custom_call.1} parent=55 // loop_footer
              %s235 = sadd.s32 1, %s231
            $region62: #{tpu_custom_call.1} parent=55 // loop_footer_branch
              %230 = sbr.rel target = $region58
            $region63: #{tpu_custom_call.1} parent=55 // loop_exit
              _
          $region56: #{tpu_custom_call.1} parent=40 // pred_fallthru
            _
        $region41: #{tpu_custom_call.1} parent=36 // pred_fallthru
          _
        // Predicated region
        $region42: #{tpu_custom_call.1} parent=36 // pred_check
          _
        $region43: #{tpu_custom_call.1} parent=36 // pred_check_branch
          %213 = sbr.rel (0) target = $region45
        $region44: #{tpu_custom_call.1} parent=36 // pred_region
          %s215 = ssub.s32 4, 1
          loop: start=0, step=1, limit=1
          $region46: #{tpu_custom_call.1} parent=44 // loop_pre_header
            _
          $region47: #{tpu_custom_call.1} parent=44 // loop_header
            %s217 = sphi 0, %s221
            %p218 = scmp.ge.s32.totalorder %s217, 1
            %s222 = sphi [#allocation3], [#allocation3]
            %s223 = sphi %s7, %s7
          $region48: #{tpu_custom_call.1} parent=44 // loop_header_branch
            %220 = sbr.rel (%p218) target = $region52
          $region49: #{tpu_custom_call.1} parent=44 // loop_body
            %v224 = vld [vmem:[%s222] sm:%s215]
            %225 = vst [vmem:[%s223] sm:%s215] %v224
          $region50: #{tpu_custom_call.1} parent=44 // loop_footer
            %s221 = sadd.s32 1, %s217
          $region51: #{tpu_custom_call.1} parent=44 // loop_footer_branch
            %216 = sbr.rel target = $region47
          $region52: #{tpu_custom_call.1} parent=44 // loop_exit
            _
        $region45: #{tpu_custom_call.1} parent=36 // pred_fallthru
          _
      $region37: #{tpu_custom_call.1} parent=32 // pred_fallthru
        _
      %240 = vnop
    $region33: #{tpu_custom_call.1} parent=1 // pred_fallthru
      _
    // Predicated region
    $region64: #{tpu_custom_call.1} parent=1 // pred_check
      _
    $region65: #{tpu_custom_call.1} parent=1 // pred_check_branch
      %242 = sbr.rel (0) target = $region67
    $region66: #{tpu_custom_call.1} parent=1 // pred_region
      _
    $region67: #{tpu_custom_call.1} parent=1 // pred_fallthru
      _

</llo_original>
